<compile_context>
chip_gen: v6e
topology: v6e:2x2x1
jax: 0.10.0
libtpu: 0.0.40
codegen_flags: <defaults>
</compile_context>

<pallas_src>
import jax
import jax.numpy as jnp
from jax.experimental import pallas as pl
from jax.experimental.pallas import tpu as pltpu

LANE = 128      # TPU lane width (last dim of a vreg)
SUBLANE = 8     # TPU sublane count (second-to-last dim of a vreg)


def _default_tile_rows():
    """Pick a tile size (rows of 128 lanes) per TPU generation."""
    try:
        kind = jax.devices()[0].device_kind.lower()
    except Exception:
        kind = ""
    if "v6" in kind or "v7" in kind:
        return 8192   # 4 MiB/block -> 16 MiB double-buffered in+out (v6e/v7x budgets)
    return 4096       # 2 MiB/block -> 8 MiB, inside v5e's 16 MiB scoped-VMEM default


def fma_kernel(x_ref, w_ref, b_ref, o_ref):
    # x_ref: (tile_rows, 128) VMEM tile; w_ref/b_ref: (1,) scalars in SMEM.
    # Pure VPU multiply-add; scalar broadcast comes from the scalar path.
    o_ref[...] = x_ref[...] * w_ref[0] + b_ref[0]


def _linear11_pallas(x2d, w_s, b_s, tr):
    rows = x2d.shape[0]
    grid = (rows // tr,)
    return pl.pallas_call(
        fma_kernel,
        out_shape=jax.ShapeDtypeStruct(x2d.shape, x2d.dtype),
        grid=grid,
        in_specs=[
            pl.BlockSpec((tr, LANE), lambda i: (i, 0)),
            pl.BlockSpec(memory_space=pltpu.MemorySpace.SMEM),
            pl.BlockSpec(memory_space=pltpu.MemorySpace.SMEM),
        ],
        out_specs=pl.BlockSpec((tr, LANE), lambda i: (i, 0)),
        compiler_params=pltpu.CompilerParams(
            dimension_semantics=("parallel",),
        ),
    )(x2d, w_s, b_s)


def generator_simple_forward(noise, weight, bias, *, tile_rows=None,
                             small_batch_threshold=4096):
    """noise: (B, 1), weight: (1, 1), bias: (1,) -> (B, 1), matching nn.Linear(1, 1)."""
    B, F = noise.shape
    assert F == 1

    w = weight.reshape(()).astype(noise.dtype)
    b = bias.reshape(()).astype(noise.dtype)

    # --- tiny-batch fast path: launch overhead >> work ---------------------
    # (also covers B < one 8x128 block, which the kernel path cannot tile)
    if B < max(small_batch_threshold, SUBLANE * LANE):
        return noise * w + b

    if tile_rows is None:
        tile_rows = _default_tile_rows()

    # --- tile sizing: tr rows of 128 lanes, tr % 8 == 0 ---------------------
    rows_avail = B // LANE
    tr = min(tile_rows, (rows_avail // SUBLANE) * SUBLANE)
    tr = max(tr, SUBLANE)
    block_elems = tr * LANE
    num_blocks = B // block_elems          # >= 1 here
    B_main = num_blocks * block_elems

    # Aligned prefix: contiguous reshape to (rows, 128) -> no padding, no copy
    # when B_main == B (the common aligned case).
    x_flat = noise.reshape(-1)
    x2d = x_flat[:B_main].reshape(num_blocks * tr, LANE)

    out_main = _linear11_pallas(x2d, w.reshape(1), b.reshape(1), tr).reshape(B_main, 1)

    if B_main == B:
        return out_main

    # Ragged tail (< tr*128 elements): plain jnp, still bandwidth-bound and tiny.
    tail = noise[B_main:] * w + b
    return jnp.concatenate([out_main, tail], axis=0)


if __name__ == "__main__":
    key = jax.random.PRNGKey(0)
    k_noise, k_w, k_b = jax.random.split(key, 3)

    # deterministic "parameters" for fc1 = nn.Linear(1, 1)
    weight = jax.random.uniform(k_w, (1, 1), jnp.float32, -1.0, 1.0)
    bias = jax.random.uniform(k_b, (1,), jnp.float32, -1.0, 1.0)

    # 1) tiny batch (module's natural scale): fast path, no pallas launch.
    noise_small = jax.random.normal(k_noise, (8, 1), jnp.float32)
    out_small = jax.block_until_ready(generator_simple_forward(noise_small, weight, bias))
    ref_small = noise_small @ weight.T + bias
    assert out_small.shape == (8, 1)
    assert jnp.allclose(out_small, ref_small, atol=1e-6), "small-batch mismatch"

    # 2) aligned batch forced through the Pallas kernel: B = 2048 = 16 rows x 128 lanes.
    noise_aligned = jax.random.normal(k_noise, (2048, 1), jnp.float32)
    out_aligned = jax.block_until_ready(
        generator_simple_forward(noise_aligned, weight, bias, small_batch_threshold=0))
    ref_aligned = noise_aligned @ weight.T + bias
    assert out_aligned.shape == (2048, 1)
    assert jnp.allclose(out_aligned, ref_aligned, atol=1e-6), "aligned-batch mismatch"

    # 3) ragged batch: aligned prefix via the kernel + jnp tail.
    noise_ragged = jax.random.normal(k_noise, (2053, 1), jnp.float32)
    out_ragged = jax.block_until_ready(
        generator_simple_forward(noise_ragged, weight, bias, small_batch_threshold=0))
    ref_ragged = noise_ragged @ weight.T + bias
    assert out_ragged.shape == (2053, 1)
    assert jnp.allclose(out_ragged, ref_ragged, atol=1e-6), "ragged-batch mismatch"

    print("KERNEL_OK")
</pallas_src>

<mosaic_0001>
module attributes {stable_mosaic.version = 11 : i64} {
  func.func @fma_kernel(%arg0: i32, %arg1: memref<16x128xf32, #tpu.memory_space<vmem>>, %arg2: memref<1xf32, #tpu.memory_space<smem>>, %arg3: memref<1xf32, #tpu.memory_space<smem>>, %arg4: memref<16x128xf32, #tpu.memory_space<vmem>>) attributes {dimension_semantics = [#tpu.dimension_semantics<parallel>], iteration_bounds = array<i64: 1>, scalar_prefetch = 0 : i64, scratch_operands = 0 : i64, tpu.core_type = #tpu.core_type<tc>, window_params = [{transform_indices = @transform_0, window_bounds = array<i64: 16, 128>}, {transform_indices = @transform_1, window_bounds = array<i64: 1>}, {transform_indices = @transform_2, window_bounds = array<i64: 1>}, {transform_indices = @transform_3, window_bounds = array<i64: 16, 128>}]} {
    %c0 = arith.constant 0 : index
    %c0_0 = arith.constant 0 : index
    %0 = vector.load %arg1[%c0, %c0_0] : memref<16x128xf32, #tpu.memory_space<vmem>>, vector<16x128xf32>
    %c0_1 = arith.constant 0 : index
    %1 = memref.load %arg2[%c0_1] : memref<1xf32, #tpu.memory_space<smem>>
    %2 = vector.broadcast %1 : f32 to vector<16x128xf32>
    %3 = arith.mulf %0, %2 : vector<16x128xf32>
    %c0_2 = arith.constant 0 : index
    %4 = memref.load %arg3[%c0_2] : memref<1xf32, #tpu.memory_space<smem>>
    %5 = vector.broadcast %4 : f32 to vector<16x128xf32>
    %6 = arith.addf %3, %5 : vector<16x128xf32>
    %c0_3 = arith.constant 0 : index
    %c0_4 = arith.constant 0 : index
    %7 = vector.load %arg4[%c0_3, %c0_4] : memref<16x128xf32, #tpu.memory_space<vmem>>, vector<16x128xf32>
    tpu.vector_store %arg4[%c0_3, %c0_4], %6 {strides = array<i32>} : memref<16x128xf32, #tpu.memory_space<vmem>>, vector<16x128xf32>,
    return
  }
  func.func @transform_0(%arg0: i32) -> (i32, i32) {
    %c0_i32 = arith.constant 0 : i32
    %c0_i32_0 = arith.constant 0 : i32
    return %arg0, %c0_i32 : i32, i32
  }
  func.func @transform_1(%arg0: i32) -> i32 {
    %c0_i32 = arith.constant 0 : i32
    %c0_i32_0 = arith.constant 0 : i32
    return %c0_i32 : i32
  }
  func.func @transform_2(%arg0: i32) -> i32 {
    %c0_i32 = arith.constant 0 : i32
    %c0_i32_0 = arith.constant 0 : i32
    return %c0_i32 : i32
  }
  func.func @transform_3(%arg0: i32) -> (i32, i32) {
    %c0_i32 = arith.constant 0 : i32
    %c0_i32_0 = arith.constant 0 : i32
    return %arg0, %c0_i32 : i32, i32
  }
}

</mosaic_0001>

<llo_original>
// kernel: tpu_custom_call.1
$region0: #{tpu_custom_call.1}
  #allocation0 [shape = 'u32[]', space=smem, size = 0x4, offset = 0x4, fixed_abs, tag = 'smem constant byte address 0x4 - core index']
  #allocation1 [shape = 'u32[144,128]{1,0:T(1,128)}', space=vmem, size = 0x12000, scoped, tag = 'internal scratch']
  #allocation2 [shape = 'f32[1]{0:T(128)S(6)}', space=smem, size = 0x200, scoped, tag = 'scoped memory for tpu_custom_call.1']
  #allocation3 [shape = 'f32[1]{0:T(128)S(6)}', space=smem, size = 0x200, scoped, tag = 'scoped memory for tpu_custom_call.1']
  %s0 = inlined_call_operand.hbm [shape: f32[16,128], index: 0, kind: input, shape index: {}]
  %s1 = inlined_call_operand.<no memory space> [shape: f32[1], index: 1, kind: input, shape index: {}]
  %s2 = inlined_call_operand.<no memory space> [shape: f32[1], index: 2, kind: input, shape index: {}]
  %s3 = inlined_call_operand.hbm [shape: f32[16,128], index: 3, kind: output, shape index: {}]
  %s4 = sld [smem:[#allocation0]]
  $region26: #{tpu_custom_call.1} parent=0
    _
  %s6 = ssub.s32 1, %s4
  %s7 = scalar_select 0, %s6, %s4
  %8 = sst [smem:[#allocation2]] %s1
  %9 = sst [smem:[#allocation3]] %s2
  $region1: #{tpu_custom_call.1} parent=0
    #allocation4 [shape = 'u8[8192]{0}', space=vmem, size = 0x2000, scoped, tag = 'input window, operand 0, single buffered']
    #allocation5 [shape = 's32[1]{0}', space=sflag, size = 0x4, scoped, tag = 'scoped memory for tpu_custom_call.1']
    #allocation6 [shape = 's32[1]{0}', space=sflag, size = 0x4, scoped, tag = 'scoped memory for tpu_custom_call.1']
    #allocation7 [shape = 'u8[8192]{0}', space=vmem, size = 0x2000, scoped, tag = 'output window, operand 0, single buffered']
    %10 = vsyncpa [#allocation5], 0
    %11 = vsyncpa [#allocation6], 0
    // Predicated region
    $region2: #{tpu_custom_call.1} parent=1 // pred_check
      _
    $region3: #{tpu_custom_call.1} parent=1 // pred_check_branch
      %13 = sbr.rel (0) target = $region5
    $region4: #{tpu_custom_call.1} parent=1 // pred_region
      %s15 = ssub.s32 256, 256
      %16 = vsyncadd [#allocation5], %s15
      %s17 = sshll.u32 [#allocation4], 4
      %s18 = int_to_ptr.vmem [resolvable:$true] %s17
      %23 = dma.hbm_to_vmem [thread:$0]  %s0, 256, %s18, [#allocation5], 128, 128, 8
    $region5: #{tpu_custom_call.1} parent=1 // pred_fallthru
      _
    // Predicated region
    $region6: #{tpu_custom_call.1} parent=1 // pred_check
      _
    $region7: #{tpu_custom_call.1} parent=1 // pred_check_branch
      %25 = sbr.rel (0) target = $region9
    $region8: #{tpu_custom_call.1} parent=1 // pred_region
      _
    $region9: #{tpu_custom_call.1} parent=1 // pred_fallthru
      _
    // Predicated region
    $region10: #{tpu_custom_call.1} parent=1 // pred_check
      _
    $region11: #{tpu_custom_call.1} parent=1 // pred_check_branch
      %27 = sbr.rel (0) target = $region13
    $region12: #{tpu_custom_call.1} parent=1 // pred_region
      _
    $region13: #{tpu_custom_call.1} parent=1 // pred_fallthru
      _
    // Predicated region
    $region14: #{tpu_custom_call.1} parent=1 // pred_check
      _
    $region15: #{tpu_custom_call.1} parent=1 // pred_check_branch
      %29 = sbr.rel (0) target = $region17
    $region16: #{tpu_custom_call.1} parent=1 // pred_region
      %30 = dma.done [#allocation5], 256
    $region17: #{tpu_custom_call.1} parent=1 // pred_fallthru
      _
    %v31 = vld [vmem:[#allocation4] sm:$0xff]
    %v32 = vld [vmem:[#allocation4 + $0x8] sm:$0xff]
    %s33 = sld [smem:[#allocation2]]
    %v34 = vstv %s33
    %v35 = vmul.f32 %v31, %v34
    %v36 = vmul.f32 %v32, %v34
    %s37 = sld [smem:[#allocation3]]
    %v38 = vstv %s37
    %v39 = vadd.f32 %v35, %v38
    %v40 = vadd.f32 %v36, %v38
    %41 = vst [vmem:[#allocation7] sm:$0xff] %v39
    %42 = vst [vmem:[#allocation7 + $0x8] sm:$0xff] %v40
    // Predicated region
    $region18: #{tpu_custom_call.1} parent=1 // pred_check
      _
    $region19: #{tpu_custom_call.1} parent=1 // pred_check_branch
      %44 = sbr.rel (0) target = $region21
    $region20: #{tpu_custom_call.1} parent=1 // pred_region
      %s46 = ssub.s32 256, 256
      %47 = vsyncadd [#allocation6], %s46
      %s48 = sshll.u32 [#allocation7], 4
      %s49 = int_to_ptr.vmem [resolvable:$true] %s48
      %54 = dma.vmem_to_hbm [thread:$0]  %s49, 256, %s3, [#allocation6], 128, 128, 8
    $region21: #{tpu_custom_call.1} parent=1 // pred_fallthru
      _
    // Predicated region
    $region22: #{tpu_custom_call.1} parent=1 // pred_check
      _
    $region23: #{tpu_custom_call.1} parent=1 // pred_check_branch
      %56 = sbr.rel (0) target = $region25
    $region24: #{tpu_custom_call.1} parent=1 // pred_region
      %57 = dma.done [#allocation6], 256
    $region25: #{tpu_custom_call.1} parent=1 // pred_fallthru
      _
    %58 = vsyncpa [#allocation5], 1
    %59 = vsyncpa [#allocation6], 1

</llo_original>
